<compile_context>
chip_gen: v7x
topology: tpu7x:2x2x1
jax: 0.10.0
libtpu: 0.0.40
codegen_flags: <defaults>
</compile_context>

<pallas_src>
import functools

import jax
import jax.numpy as jnp
from jax.experimental import pallas as pl
from jax.experimental.pallas import tpu as pltpu

INIT_A = 0.6523
INIT_B = 8.00375825259e-05


def _ce_partial_kernel(logits_ref, tgt_ref, out_ref, *, n_rows, tile_rows,
                       tiles_per_part):
    """Accumulates per-row cross-entropy into this part's (tile_rows, 1) slab."""
    part = pl.program_id(0)
    step = pl.program_id(1)

    @pl.when(step == 0)
    def _init():
        out_ref[...] = jnp.zeros_like(out_ref)

    x = logits_ref[...]                       # (tile_rows, C), original dtype
    tgt = tgt_ref[...]                        # (tile_rows, 1) int32
    rows, classes = x.shape

    # Row max + shift in the native dtype (bf16 stays on the bf16 VPU on
    # v6e/v7x); cast to f32 only for the exp/log accumulation path.
    m = jnp.max(x, axis=-1, keepdims=True)                      # (rows, 1)
    shifted = (x - m).astype(jnp.float32)                       # only feeds exp
    sumexp = jnp.sum(jnp.exp(shifted), axis=-1, keepdims=True)  # (rows, 1) f32

    # Target-logit pick from the RAW logits: compare/select + lane sum
    # (VPU/XLU) instead of a degenerate one-hot MXU dot.
    col = jax.lax.broadcasted_iota(jnp.int32, (rows, classes), 1)
    picked = jnp.sum(jnp.where(col == tgt, x, jnp.zeros_like(x)),
                     axis=-1, keepdims=True).astype(jnp.float32)

    # per-row cross entropy: log-sum-exp(x) - x_target
    ce = jnp.log(sumexp) + m.astype(jnp.float32) - picked       # (rows, 1) f32

    # Logical (unclamped) row range of this grid step; the BlockSpec index map
    # clamps the DMA to valid blocks, the mask below removes any contribution
    # from rows >= n_rows (partial last tile or fully-duplicated overhang tile).
    row0 = (part * tiles_per_part + step) * tile_rows

    @pl.when(row0 + tile_rows <= n_rows)
    def _accumulate_full():                  # common case: no mask work at all
        out_ref[...] += ce

    @pl.when(row0 + tile_rows > n_rows)
    def _accumulate_masked():                # only the over-covering tiles
        r = row0 + jax.lax.broadcasted_iota(jnp.int32, (rows, 1), 0)
        out_ref[...] += jnp.where(r < n_rows, ce, 0.0)          # select, not mul


def _vmem_budget_and_limit():
    """(working-set budget, vmem_limit_bytes) chosen per TPU generation."""
    try:
        cap = int(getattr(pltpu.get_tpu_info(), "vmem_capacity_bytes",
                          64 * 1024 * 1024))
    except Exception:  # pragma: no cover - be conservative if the query fails
        cap = 64 * 1024 * 1024
    if cap >= 100 * 1024 * 1024:              # v5e / v6e: 128 MiB per core
        return 64 * 1024 * 1024, 100 * 1024 * 1024
    return 24 * 1024 * 1024, 40 * 1024 * 1024  # v7x: 64 MiB per core


def _pick_tile_rows(c, itemsize, budget_bytes):
    """Largest row tile whose full working set fits the VMEM budget."""
    c_pad = 128 * pl.cdiv(c, 128)
    per_row = (2 * c_pad * itemsize          # double-buffered logits tile
               + 2 * 128 * 4                 # double-buffered (tn,1) int32 targets (lane-padded)
               + 3 * c_pad * 4               # f32 temporaries (shifted / exp / select)
               + 128 * 4)                    # resident f32 accumulator column (lane-padded)
    tn = budget_bytes // per_row
    return max(8, (tn // 8) * 8)


def multi_loss(outputs, targets, prevGH, prevGM, alpha, gamma, signal, prevRatio,
               tile_rows=None):
    """JAX/Pallas equivalent of MultiLoss.forward.

    `signal` and `gamma` do not affect the returned value in the original
    PyTorch module (they only feed loss2/loss3, which are never returned)."""
    del signal, gamma
    n, c = outputs.shape
    itemsize = jnp.dtype(outputs.dtype).itemsize
    budget, vmem_limit = _vmem_budget_and_limit()

    # ---- choose the row tile (multiple of 8, never larger than the batch) ----
    if n >= 8:
        if tile_rows is None:
            tn = _pick_tile_rows(c, itemsize, budget)
        else:
            tn = max(8, (int(tile_rows) // 8) * 8)
        tn = min(tn, (n // 8) * 8)
    else:
        tn = n                                # block == full array, single tile
    num_tiles = pl.cdiv(n, tn)

    # ---- 2 partial-sum slabs so v7x can split the batch across TensorCores ----
    num_parts = 2 if num_tiles >= 2 else 1
    tiles_per_part = pl.cdiv(num_tiles, num_parts)
    if tile_rows is None and num_parts == 2:
        # tighten tn so both parts cover n with minimal overhang
        tn = min(max(8, 8 * pl.cdiv(pl.cdiv(n, num_parts * tiles_per_part), 8)),
                 (n // 8) * 8)
        num_tiles = pl.cdiv(n, tn)
        tiles_per_part = pl.cdiv(num_tiles, num_parts)

    last_block = num_tiles - 1
    tgt = targets.astype(jnp.int32).reshape(n, 1)

    def tile_index(p_idx, i_idx):
        # Clamp so an overhang step re-reads the last valid block (its
        # contribution is fully masked out inside the kernel).
        return jnp.minimum(p_idx * tiles_per_part + i_idx, last_block)

    kernel = functools.partial(_ce_partial_kernel, n_rows=n, tile_rows=tn,
                               tiles_per_part=tiles_per_part)

    partials = pl.pallas_call(
        kernel,
        out_shape=jax.ShapeDtypeStruct((num_parts * tn, 1), jnp.float32),
        grid=(num_parts, tiles_per_part),
        in_specs=[
            pl.BlockSpec((tn, c), lambda p_, i_: (tile_index(p_, i_), 0)),
            pl.BlockSpec((tn, 1), lambda p_, i_: (tile_index(p_, i_), 0)),
        ],
        out_specs=pl.BlockSpec((tn, 1), lambda p_, i_: (p_, 0)),
        compiler_params=pltpu.CompilerParams(
            dimension_semantics=("parallel", "arbitrary"),
            vmem_limit_bytes=vmem_limit,
        ),
        cost_estimate=pl.CostEstimate(
            flops=6 * n * c,
            transcendentals=n * c,
            bytes_accessed=n * c * itemsize + n * 4 + num_parts * tn * 4,
        ),
    )(outputs, tgt)

    # mean cross entropy (reduction='mean', as nn.CrossEntropyLoss default)
    loss1 = jnp.sum(partials) / jnp.float32(n)

    # ---- scalar epilogue: identical expression to the PyTorch return ----
    prevGH = jnp.float32(prevGH)
    prevGM = jnp.float32(prevGM)
    alpha = jnp.float32(alpha)
    prevRatio = jnp.float32(prevRatio)
    beta1 = jnp.abs(prevGM / prevGH)
    beta2 = prevGM * jnp.abs(1.0 / (INIT_A - loss1)) / INIT_B
    return (loss1
            + alpha * (3.0 - beta1) * (3.0 - beta1)
            + alpha * (1.5 - prevRatio) * (1.5 - prevRatio)
            + jnp.exp(-1.0 * beta2) * beta2)


def _reference(outputs, targets, prevGH, prevGM, alpha, gamma, signal, prevRatio):
    # pure-JAX reference for sanity checking
    logp = jax.nn.log_softmax(outputs.astype(jnp.float32), axis=-1)
    loss1 = -jnp.mean(jnp.take_along_axis(
        logp, targets[:, None].astype(jnp.int32), axis=-1))
    beta1 = jnp.abs(jnp.float32(prevGM) / jnp.float32(prevGH))
    beta2 = prevGM * jnp.abs(1.0 / (INIT_A - loss1)) / INIT_B
    return (loss1 + alpha * (3.0 - beta1) ** 2 + alpha * (1.5 - prevRatio) ** 2
            + jnp.exp(-beta2) * beta2)


if __name__ == "__main__":
    key = jax.random.PRNGKey(0)
    k1, k2, k3, k4, k5, k6 = jax.random.split(key, 6)

    prevGH = 0.0125
    prevGM = 0.0031
    alpha = 0.5
    gamma = 1.0
    signal = 1          # unused by the forward pass (kept for signature parity)
    prevRatio = 1.0

    # --- case 1: small f32 shape, single tile, auto tiling ---
    N, C = 8, 32
    outputs = jax.random.normal(k1, (N, C), dtype=jnp.float32)
    targets = jax.random.randint(k2, (N,), 0, C, dtype=jnp.int32)
    loss = multi_loss(outputs, targets, prevGH, prevGM, alpha, gamma, signal,
                      prevRatio)
    jax.block_until_ready(loss)
    ref = _reference(outputs, targets, prevGH, prevGM, alpha, gamma, signal,
                     prevRatio)
    assert jnp.allclose(loss, ref, rtol=1e-4, atol=1e-4), (loss, ref)

    # --- case 2: f32, multi-tile grid, 2 parts, masked partial + overhang tile ---
    N2, C2 = 20, 32
    outputs2 = jax.random.normal(k3, (N2, C2), dtype=jnp.float32)
    targets2 = jax.random.randint(k4, (N2,), 0, C2, dtype=jnp.int32)
    loss2 = multi_loss(outputs2, targets2, prevGH, prevGM, alpha, gamma, signal,
                       prevRatio, tile_rows=8)
    jax.block_until_ready(loss2)
    ref2 = _reference(outputs2, targets2, prevGH, prevGM, alpha, gamma, signal,
                      prevRatio)
    assert jnp.allclose(loss2, ref2, rtol=1e-4, atol=1e-4), (loss2, ref2)

    # --- case 3: bf16 logits (native-dtype elementwise path), loose tolerance ---
    N3, C3 = 24, 128
    outputs3 = jax.random.normal(k5, (N3, C3), dtype=jnp.bfloat16)
    targets3 = jax.random.randint(k6, (N3,), 0, C3, dtype=jnp.int32)
    loss3 = multi_loss(outputs3, targets3, prevGH, prevGM, alpha, gamma, signal,
                       prevRatio, tile_rows=8)
    jax.block_until_ready(loss3)
    ref3 = _reference(outputs3, targets3, prevGH, prevGM, alpha, gamma, signal,
                      prevRatio)
    assert jnp.allclose(loss3, ref3, rtol=2e-2, atol=5e-2), (loss3, ref3)

    print("KERNEL_OK")
</pallas_src>

<mosaic_0001>
module attributes {stable_mosaic.version = 11 : i64} {
  func.func @_ce_partial_kernel(%arg0: i32, %arg1: i32, %arg2: memref<8x32xf32, #tpu.memory_space<vmem>>, %arg3: memref<8x1xi32, #tpu.memory_space<vmem>>, %arg4: memref<8x1xf32, #tpu.memory_space<vmem>>) attributes {dimension_semantics = [#tpu.dimension_semantics<parallel>, #tpu.dimension_semantics<arbitrary>], iteration_bounds = array<i64: 1, 1>, scalar_prefetch = 0 : i64, scratch_operands = 0 : i64, tpu.core_type = #tpu.core_type<tc>, window_params = [{transform_indices = @transform_0, window_bounds = array<i64: 8, 32>}, {transform_indices = @transform_1, window_bounds = array<i64: 8, 1>}, {transform_indices = @transform_2, window_bounds = array<i64: 8, 1>}]} {
    %c0_i32 = arith.constant 0 : i32
    %0 = arith.cmpi eq, %arg1, %c0_i32 : i32
    %1 = arith.extui %0 : i1 to i32
    %c0_i32_0 = arith.constant 0 : i32
    %2 = arith.cmpi ne, %1, %c0_i32_0 : i32
    scf.if %2 {
      %cst_13 = arith.constant 0.000000e+00 : f32
      %33 = vector.broadcast %cst_13 : f32 to vector<8x1xf32>
      %c0_14 = arith.constant 0 : index
      %c0_15 = arith.constant 0 : index
      %34 = vector.load %arg4[%c0_14, %c0_15] : memref<8x1xf32, #tpu.memory_space<vmem>>, vector<8x1xf32>
      tpu.vector_store %arg4[%c0_14, %c0_15], %33 {strides = array<i32>} : memref<8x1xf32, #tpu.memory_space<vmem>>, vector<8x1xf32>,
    } else {
    }
    %c0 = arith.constant 0 : index
    %c0_1 = arith.constant 0 : index
    %3 = vector.load %arg2[%c0, %c0_1] : memref<8x32xf32, #tpu.memory_space<vmem>>, vector<8x32xf32>
    %c0_2 = arith.constant 0 : index
    %c0_3 = arith.constant 0 : index
    %4 = vector.load %arg3[%c0_2, %c0_3] : memref<8x1xi32, #tpu.memory_space<vmem>>, vector<8x1xi32>
    %cst = arith.constant dense<0xFF800000> : vector<8xf32>
    %5 = vector.multi_reduction <maximumf>, %3, %cst [1] : vector<8x32xf32> to vector<8xf32>
    %6 = vector.shape_cast %5 : vector<8xf32> to vector<8x1xf32>
    %7 = vector.broadcast %6 : vector<8x1xf32> to vector<8x32xf32>
    %8 = arith.subf %3, %7 : vector<8x32xf32>
    %9 = math.exp %8 : vector<8x32xf32>
    %cst_4 = arith.constant dense<0.000000e+00> : vector<8xf32>
    %10 = vector.multi_reduction <add>, %9, %cst_4 [1] : vector<8x32xf32> to vector<8xf32>
    %11 = vector.shape_cast %10 : vector<8xf32> to vector<8x1xf32>
    %12 = tpu.iota {dimensions = array<i32: 1>} : vector<8x32xi32>
    %13 = vector.broadcast %4 : vector<8x1xi32> to vector<8x32xi32>
    %14 = arith.cmpi eq, %12, %13 : vector<8x32xi32>
    %cst_5 = arith.constant 0.000000e+00 : f32
    %15 = vector.broadcast %cst_5 : f32 to vector<8x32xf32>
    %16 = arith.select %14, %3, %15 : vector<8x32xi1>, vector<8x32xf32>
    %cst_6 = arith.constant dense<0.000000e+00> : vector<8xf32>
    %17 = vector.multi_reduction <add>, %16, %cst_6 [1] : vector<8x32xf32> to vector<8xf32>
    %18 = vector.shape_cast %17 : vector<8xf32> to vector<8x1xf32>
    %19 = math.log %11 : vector<8x1xf32>
    %20 = arith.addf %19, %6 : vector<8x1xf32>
    %21 = arith.subf %20, %18 : vector<8x1xf32>
    %c1_i32 = arith.constant 1 : i32
    %22 = arith.muli %arg0, %c1_i32 : i32
    %23 = arith.addi %22, %arg1 : i32
    %c8_i32 = arith.constant 8 : i32
    %24 = arith.muli %23, %c8_i32 : i32
    %c8_i32_7 = arith.constant 8 : i32
    %25 = arith.addi %24, %c8_i32_7 : i32
    %c8_i32_8 = arith.constant 8 : i32
    %26 = arith.cmpi sle, %25, %c8_i32_8 : i32
    %27 = arith.extui %26 : i1 to i32
    %c0_i32_9 = arith.constant 0 : i32
    %28 = arith.cmpi ne, %27, %c0_i32_9 : i32
    scf.if %28 {
      %c0_13 = arith.constant 0 : index
      %c0_14 = arith.constant 0 : index
      %33 = vector.load %arg4[%c0_13, %c0_14] : memref<8x1xf32, #tpu.memory_space<vmem>>, vector<8x1xf32>
      %34 = arith.addf %33, %21 : vector<8x1xf32>
      %c0_15 = arith.constant 0 : index
      %c0_16 = arith.constant 0 : index
      %35 = vector.load %arg4[%c0_15, %c0_16] : memref<8x1xf32, #tpu.memory_space<vmem>>, vector<8x1xf32>
      tpu.vector_store %arg4[%c0_15, %c0_16], %34 {strides = array<i32>} : memref<8x1xf32, #tpu.memory_space<vmem>>, vector<8x1xf32>,
    } else {
    }
    %c8_i32_10 = arith.constant 8 : i32
    %29 = arith.addi %24, %c8_i32_10 : i32
    %c8_i32_11 = arith.constant 8 : i32
    %30 = arith.cmpi sgt, %29, %c8_i32_11 : i32
    %31 = arith.extui %30 : i1 to i32
    %c0_i32_12 = arith.constant 0 : i32
    %32 = arith.cmpi ne, %31, %c0_i32_12 : i32
    scf.if %32 {
      %33 = tpu.iota {dimensions = array<i32: 0>} : vector<8x1xi32>
      %34 = vector.broadcast %24 : i32 to vector<8x1xi32>
      %35 = arith.addi %34, %33 : vector<8x1xi32>
      %c0_13 = arith.constant 0 : index
      %c0_14 = arith.constant 0 : index
      %36 = vector.load %arg4[%c0_13, %c0_14] : memref<8x1xf32, #tpu.memory_space<vmem>>, vector<8x1xf32>
      %c8_i32_15 = arith.constant 8 : i32
      %37 = vector.broadcast %c8_i32_15 : i32 to vector<8x1xi32>
      %38 = arith.cmpi slt, %35, %37 : vector<8x1xi32>
      %cst_16 = arith.constant 0.000000e+00 : f32
      %39 = vector.broadcast %cst_16 : f32 to vector<8x1xf32>
      %40 = arith.select %38, %21, %39 : vector<8x1xi1>, vector<8x1xf32>
      %41 = arith.addf %36, %40 : vector<8x1xf32>
      %c0_17 = arith.constant 0 : index
      %c0_18 = arith.constant 0 : index
      %42 = vector.load %arg4[%c0_17, %c0_18] : memref<8x1xf32, #tpu.memory_space<vmem>>, vector<8x1xf32>
      tpu.vector_store %arg4[%c0_17, %c0_18], %41 {strides = array<i32>} : memref<8x1xf32, #tpu.memory_space<vmem>>, vector<8x1xf32>,
    } else {
    }
    return
  }
  func.func @transform_0(%arg0: i32, %arg1: i32) -> (i32, i32) {
    %c1_i32 = arith.constant 1 : i32
    %0 = arith.muli %arg0, %c1_i32 : i32
    %1 = arith.addi %0, %arg1 : i32
    %c0_i32 = arith.constant 0 : i32
    %2 = arith.minsi %1, %c0_i32 : i32
    %c0_i32_0 = arith.constant 0 : i32
    %c0_i32_1 = arith.constant 0 : i32
    return %2, %c0_i32_0 : i32, i32
  }
  func.func @transform_1(%arg0: i32, %arg1: i32) -> (i32, i32) {
    %c1_i32 = arith.constant 1 : i32
    %0 = arith.muli %arg0, %c1_i32 : i32
    %1 = arith.addi %0, %arg1 : i32
    %c0_i32 = arith.constant 0 : i32
    %2 = arith.minsi %1, %c0_i32 : i32
    %c0_i32_0 = arith.constant 0 : i32
    %c0_i32_1 = arith.constant 0 : i32
    return %2, %c0_i32_0 : i32, i32
  }
  func.func @transform_2(%arg0: i32, %arg1: i32) -> (i32, i32) {
    %c0_i32 = arith.constant 0 : i32
    %c0_i32_0 = arith.constant 0 : i32
    return %arg0, %c0_i32 : i32, i32
  }
}

</mosaic_0001>

<llo_original>
// kernel: tpu_custom_call.1
$region0: #{tpu_custom_call.1}
  #allocation0 [shape = 'u32[]', space=smem, size = 0x4, offset = 0x4, fixed_abs, tag = 'smem constant byte address 0x4 - core index']
  #allocation1 [shape = 'u32[144,128]{1,0:T(1,128)}', space=vmem, size = 0x12000, scoped, tag = 'internal scratch']
  %s0 = inlined_call_operand.vmem [shape: f32[8,32], index: 0, kind: input, shape index: {}]
  %s1 = inlined_call_operand.vmem [shape: s32[8,1], index: 1, kind: input, shape index: {}]
  %s2 = inlined_call_operand.vmem [shape: f32[8,1], index: 2, kind: output, shape index: {}]
  %s3 = sld [smem:[#allocation0]]
  $region30: #{tpu_custom_call.1} parent=0
    _
  %s5 = ssub.s32 1, %s3
  %s6 = scalar_select 0, %s5, %s3
  // Predicated region
  $region2: #{tpu_custom_call.1} parent=0 // pred_check
    _
  $region3: #{tpu_custom_call.1} parent=0 // pred_check_branch
    %8 = sbr.rel (0) target = $region5
  $region4: #{tpu_custom_call.1} parent=0 // pred_region
    %s9 = sadd.s32 0, 0
    %p10 = scmp.lt.s32.totalorder %s9, 0
    %s11 = scalar_select %p10, %s9, 0
    %p12 = scmp.lt.s32.totalorder %s11, 0
    %s13 = scalar_select %p12, %s11, 0
    %s14 = smul.addr %s13, 8
    %s15 = scalar_lea.vmem %s0, %s14
    %s16 = sadd.s32 0, 0
    %p17 = scmp.lt.s32.totalorder %s16, 0
    %s18 = scalar_select %p17, %s16, 0
  $region5: #{tpu_custom_call.1} parent=0 // pred_fallthru
    _
  // Predicated region
  $region6: #{tpu_custom_call.1} parent=0 // pred_check
    _
  $region7: #{tpu_custom_call.1} parent=0 // pred_check_branch
    %20 = sbr.rel (0) target = $region9
  $region8: #{tpu_custom_call.1} parent=0 // pred_region
    %s21 = sadd.s32 0, 0
    %p22 = scmp.lt.s32.totalorder %s21, 0
    %s23 = scalar_select %p22, %s21, 0
    %p24 = scmp.lt.s32.totalorder %s23, 0
    %s25 = scalar_select %p24, %s23, 0
    %s26 = smul.addr %s25, 8
    %s27 = scalar_lea.vmem %s1, %s26
    %s28 = sadd.s32 0, 0
    %p29 = scmp.lt.s32.totalorder %s28, 0
    %s30 = scalar_select %p29, %s28, 0
  $region9: #{tpu_custom_call.1} parent=0 // pred_fallthru
    _
  %s31 = sadd.s32 0, 0
  %p32 = scmp.lt.s32.totalorder %s31, 0
  %s33 = scalar_select %p32, %s31, 0
  %p34 = scmp.lt.s32.totalorder %s33, 0
  %s35 = scalar_select %p34, %s33, 0
  %s36 = smul.addr %s35, 8
  %s37 = scalar_lea.vmem %s0, %s36
  %s38 = sadd.s32 0, 0
  %p39 = scmp.lt.s32.totalorder %s38, 0
  %s40 = scalar_select %p39, %s38, 0
  %p41 = scmp.lt.s32.totalorder %s40, 0
  %s42 = scalar_select %p41, %s40, 0
  %s43 = smul.addr %s42, 8
  %s44 = scalar_lea.vmem %s1, %s43
  %s45 = sadd.s32 0, 0
  %p46 = scmp.lt.s32.totalorder %s45, 0
  %s47 = scalar_select %p46, %s45, 0
  %p48 = scmp.lt.s32.totalorder %s47, 0
  %s49 = scalar_select %p48, %s47, 0
  %s50 = smul.addr %s49, 8
  %s51 = scalar_lea.vmem %s0, %s50
  %s52 = sadd.s32 0, 0
  %p53 = scmp.lt.s32.totalorder %s52, 0
  %s54 = scalar_select %p53, %s52, 0
  %s55 = sadd.s32 0, 0
  %p56 = scmp.lt.s32.totalorder %s55, 0
  %s57 = scalar_select %p56, %s55, 0
  %p58 = scmp.lt.s32.totalorder %s57, 0
  %s59 = scalar_select %p58, %s57, 0
  %s60 = smul.addr %s59, 8
  %s61 = scalar_lea.vmem %s1, %s60
  %s62 = sadd.s32 0, 0
  %p63 = scmp.lt.s32.totalorder %s62, 0
  %s64 = scalar_select %p63, %s62, 0
  %p65 = scmp.eq.s32.totalorder 0, 0
  // Predicated region
  $region10: #{tpu_custom_call.1} parent=0 // pred_check
    %p66 = pneg %p65
  $region11: #{tpu_custom_call.1} parent=0 // pred_check_branch
    %68 = sbr.rel (%p66) target = $region13
  $region12: #{tpu_custom_call.1} parent=0 // pred_region
    %vm69 = vcmask 7168
    %70 = vst.msk [vmem:[%s2] sm:$0xff] %vm69, 0.0
  $region13: #{tpu_custom_call.1} parent=0 // pred_fallthru
    _
  %v71 = vld [vmem:[%s51] sm:$0xff]
  %v72 = vld [vmem:[%s61] sm:$0xff]
  %vm73 = vcmask 261120
  %v74 = vsel %vm73, %v71, -inf
  %75 = vmax.xlane.f32.xlu0 %v74
  %v76 = vpop.xlane.xlu0 %75
  %v77 = vsub.f32 %v71, %v76
  %v78 = vmul.f32 %v77, 1.442695
  %v79 = vpow.pop %v78
  %v80 = vsel %vm73, %v79, 0.0
  %81 = vadd.xlane.f32.xlu0 %v80
  %v82 = vpop.xlane.xlu0 %81
  %v83 = vlaneseq
  %v84 = vand.u32 %v83, 127
  %85 = vset.pattern.permute.xlu0 0
  %86 = vperm.xlu0 %85, %v72
  %v87 = vpop.permute.xlu0 %86
  %vm88 = vcmp.eq.s32.totalorder %v84, %v87
  %v89 = vsel %vm88, %v71, 0.0
  %v90 = vsel %vm73, %v89, 0.0
  %91 = vadd.xlane.f32.xlu0 %v90
  %v92 = vpop.xlane.xlu0 %91
  %v93 = vlog2.pop %v82
  %v94 = vmul.f32 %v93, 0.6931472
  %v95 = vadd.f32 %v94, %v76
  %v96 = vsub.f32 %v95, %v92
  %s97 = sadd.s32 0, 0
  %s98 = smul.u32 %s97, 8
  %s99 = sadd.s32 %s98, 8
  %p100 = scmp.le.s32.totalorder %s99, 8
  // Predicated region
  $region14: #{tpu_custom_call.1} parent=0 // pred_check
    %p101 = pneg %p100
  $region15: #{tpu_custom_call.1} parent=0 // pred_check_branch
    %103 = sbr.rel (%p101) target = $region17
  $region16: #{tpu_custom_call.1} parent=0 // pred_region
    %v104 = vld [vmem:[%s2] sm:$0xff]
    %v105 = vadd.f32 %v104, %v96
    %vm106 = vcmask 7168
    %107 = vst.msk [vmem:[%s2] sm:$0xff] %vm106, %v105
  $region17: #{tpu_custom_call.1} parent=0 // pred_fallthru
    _
  %p108 = scmp.gt.s32.totalorder %s99, 8
  // Predicated region
  $region18: #{tpu_custom_call.1} parent=0 // pred_check
    %p109 = pneg %p108
  $region19: #{tpu_custom_call.1} parent=0 // pred_check_branch
    %111 = sbr.rel (%p109) target = $region21
  $region20: #{tpu_custom_call.1} parent=0 // pred_region
    %v112 = vlaneseq
    %v113 = vshrl.u32 %v112, 7
    %v114 = vstv %s98
    %v115 = vadd.s32 %v114, %v113
    %v116 = vld [vmem:[%s2] sm:$0xff]
    %vm117 = vcmp.lt.s32.totalorder %v115, 8
    %v118 = vsel %vm117, %v96, 0.0
    %v119 = vadd.f32 %v116, %v118
    %vm120 = vcmask 7168
    %121 = vst.msk [vmem:[%s2] sm:$0xff] %vm120, %v119
  $region21: #{tpu_custom_call.1} parent=0 // pred_fallthru
    _
  // Predicated region
  $region22: #{tpu_custom_call.1} parent=0 // pred_check
    _
  $region23: #{tpu_custom_call.1} parent=0 // pred_check_branch
    %123 = sbr.rel (0) target = $region25
  $region24: #{tpu_custom_call.1} parent=0 // pred_region
    _
  $region25: #{tpu_custom_call.1} parent=0 // pred_fallthru
    _
  // Predicated region
  $region26: #{tpu_custom_call.1} parent=0 // pred_check
    _
  $region27: #{tpu_custom_call.1} parent=0 // pred_check_branch
    %125 = sbr.rel (0) target = $region29
  $region28: #{tpu_custom_call.1} parent=0 // pred_region
    _
  $region29: #{tpu_custom_call.1} parent=0 // pred_fallthru
    _

</llo_original>
